<compile_context>
chip_gen: v7x
topology: tpu7x:2x2x1
jax: 0.10.0
libtpu: 0.0.40
codegen_flags: <defaults>
</compile_context>

<pallas_src>
import functools

import numpy as np
import jax
import jax.numpy as jnp
from jax import lax
from jax.experimental import pallas as pl
from jax.experimental.pallas import tpu as pltpu


def _round_up(x, m):
    return ((x + m - 1) // m) * m


def _cdiv(a, b):
    return (a + b - 1) // b


# ---------------------------------------------------------------------------
# Pallas kernel: per-pixel channel-mixing matmul, lane-dense output
# ---------------------------------------------------------------------------
def _pixel_matmul_kernel(a_ref, x_ref, o_ref):
    """o[0] = A @ x[0] for one (batch, pixel-tile) grid point.

    a_ref : (Co, Ci)     channel-mixing matrix                  (VMEM)
    x_ref : (1, Ci, tm)  per-pixel input columns                (VMEM)
    o_ref : (1, Co, tm)  per-pixel output columns (lane-dense)  (VMEM)
    """
    o_ref[0] = jnp.dot(
        a_ref[...], x_ref[0],
        precision=lax.Precision.HIGHEST,       # exact f32 path on bf16 MXUs
        preferred_element_type=jnp.float32,
    ).astype(o_ref.dtype)


def _choose_pixel_tile(M, N, tm_target=65536):
    """Pixel-tile width: multiple of 128 lanes unless one block covers M.

    ~3 MiB blocks (tm ~ 64K at Ci=12 f32) amortise the per-grid-step pipeline
    overhead on all generations; with double buffering the working set stays
    ~12-16 MiB, inside every generation's VMEM.
    """
    n_tiles = max(1, _cdiv(M, tm_target))
    # Megacore (v7x, 2 TCs/chip): if the batch axis is odd, prefer an even
    # number of pixel tiles so the grid splits evenly across the two cores.
    if N % 2 == 1 and n_tiles % 2 == 1 and M > 256:
        n_tiles += 1
    tm = _round_up(_cdiv(M, n_tiles), 128)
    if tm >= M:
        return M          # single block whose minor dim equals the full dim
    return tm


def _pixel_matmul(a, x):
    """out[n] = a @ x[n]  with  a: (Co, Ci),  x: (N, Ci, M)  ->  (N, Co, M)."""
    N, Ci, M = x.shape
    Co = a.shape[0]
    tm = _choose_pixel_tile(M, N)
    grid = (N, _cdiv(M, tm))          # streaming (pixel) axis last

    cost = pl.CostEstimate(
        flops=2 * N * Co * Ci * M,
        transcendentals=0,
        bytes_accessed=4 * (N * Ci * M + N * Co * M + Co * Ci),
    )

    return pl.pallas_call(
        _pixel_matmul_kernel,
        out_shape=jax.ShapeDtypeStruct((N, Co, M), jnp.float32),
        grid=grid,
        in_specs=[
            pl.BlockSpec((Co, Ci), lambda n, m: (0, 0)),
            pl.BlockSpec((1, Ci, tm), lambda n, m: (n, 0, m)),
        ],
        out_specs=pl.BlockSpec((1, Co, tm), lambda n, m: (n, 0, m)),
        compiler_params=pltpu.CompilerParams(
            dimension_semantics=("parallel", "parallel"),
            vmem_limit_bytes=32 * 1024 * 1024,
        ),
        cost_estimate=cost,
    )(a.astype(jnp.float32), x.astype(jnp.float32))


# ---------------------------------------------------------------------------
# Fold grouped conv / conv-transpose weights (+ the channel transpose) into a
# single (nc, nc) per-pixel mixing matrix.
# ---------------------------------------------------------------------------
def build_dec_matrix(w, ks, transpose):
    """w: grouped Conv2d weight, shape (3*ks*ks, 1, ks, ks) [OIHW, groups=3]."""
    w = np.asarray(w, np.float32)
    fpg = ks * ks                 # filters per group
    nc = 3 * fpg
    A = np.zeros((nc, nc), np.float32)
    for g in range(3):
        for f in range(fpg):
            oc = g * fpg + f                       # conv output channel
            k = f * 3 + g if transpose else oc     # channel after transpose
            for dy in range(ks):
                for dx in range(ks):
                    p = g * fpg + dy * ks + dx     # space-to-depth patch index
                    A[k, p] = w[oc, 0, dy, dx]
    return jnp.asarray(A)


def build_rec_matrix(wT, ks, transpose):
    """wT: grouped ConvTranspose2d weight, shape (3*ks*ks, 1, ks, ks), groups=3."""
    wT = np.asarray(wT, np.float32)
    fpg = ks * ks
    nc = 3 * fpg
    A = np.zeros((nc, nc), np.float32)
    for g in range(3):
        for f in range(fpg):
            ic = g * fpg + f                       # conv-transpose input channel
            k = f * 3 + g if transpose else ic     # external channel layout
            for dy in range(ks):
                for dx in range(ks):
                    p = g * fpg + dy * ks + dx     # depth-to-space patch index
                    A[p, k] = wT[ic, 0, dy, dx]
    return jnp.asarray(A)


# ---------------------------------------------------------------------------
# WaveletTransform forward (matches the PyTorch module semantics)
# ---------------------------------------------------------------------------
@functools.partial(jax.jit, static_argnames=("ks", "dec"))
def wavelet_forward(x, mix, *, ks, dec):
    if dec:
        N, C, H, W = x.shape
        assert C == 3 and H % ks == 0 and W % ks == 0
        Ho, Wo = H // ks, W // ks
        # space-to-depth: (N, 3, H, W) -> (N, 3*ks*ks, Ho*Wo), taps channel-major
        xp = x.reshape(N, 3, Ho, ks, Wo, ks)
        xp = xp.transpose(0, 1, 3, 5, 2, 4).reshape(N, 3 * ks * ks, Ho * Wo)
        out = _pixel_matmul(mix, xp)               # (N, 3*ks*ks, Ho*Wo)
        return out.reshape(N, 3 * ks * ks, Ho, Wo)
    else:
        N, nc, Ho, Wo = x.shape
        assert nc == 3 * ks * ks
        y = x.reshape(N, nc, Ho * Wo)
        d = _pixel_matmul(mix, y)                  # (N, 3*ks*ks, Ho*Wo)
        # depth-to-space: (N, 3, ks, ks, Ho, Wo) -> (N, 3, Ho*ks, Wo*ks)
        d = d.reshape(N, 3, ks, ks, Ho, Wo).transpose(0, 1, 4, 2, 5, 3)
        return d.reshape(N, 3, Ho * ks, Wo * ks)


# ---------------------------------------------------------------------------
# Fixed wavelet filters (analytic orthonormal 2x2 Haar, in place of the pkl)
# ---------------------------------------------------------------------------
def haar_grouped_weight(ks=2):
    assert ks == 2, "analytic filters provided for scale=1 (ks=2) only"
    ll = np.array([[0.5, 0.5], [0.5, 0.5]], np.float32)
    lh = np.array([[0.5, -0.5], [0.5, -0.5]], np.float32)
    hl = np.array([[0.5, 0.5], [-0.5, -0.5]], np.float32)
    hh = np.array([[0.5, -0.5], [-0.5, 0.5]], np.float32)
    filt = np.stack([ll, lh, hl, hh])              # (4, 2, 2), orthonormal
    w = np.zeros((3 * ks * ks, 1, ks, ks), np.float32)
    for g in range(3):
        w[g * 4:(g + 1) * 4, 0] = filt
    return w


# ---------------------------------------------------------------------------
# Pure-JAX references (no Pallas) for parity checks
# ---------------------------------------------------------------------------
def ref_dec(x, w, ks, transpose):
    out = jax.lax.conv_general_dilated(
        x, jnp.asarray(w), window_strides=(ks, ks), padding="VALID",
        dimension_numbers=("NCHW", "OIHW", "NCHW"), feature_group_count=3)
    if transpose:
        N, nc, Ho, Wo = out.shape
        out = out.reshape(N, 3, nc // 3, Ho, Wo).transpose(0, 2, 1, 3, 4)
        out = out.reshape(N, nc, Ho, Wo)
    return out


def ref_rec(y, wT, ks, transpose):
    N, nc, Ho, Wo = y.shape
    fpg = ks * ks
    if transpose:
        xx = y.reshape(N, fpg, 3, Ho, Wo).transpose(0, 2, 1, 3, 4)  # (N,3,fpg,Ho,Wo)
    else:
        xx = y.reshape(N, 3, fpg, Ho, Wo)
    wr = jnp.asarray(wT).reshape(3, fpg, ks, ks)
    out = jnp.einsum("ngfij,gfyx->ngiyjx", xx, wr)   # (N,3,Ho,ks,Wo,ks)
    return out.reshape(N, 3, Ho * ks, Wo * ks)


# ---------------------------------------------------------------------------
if __name__ == "__main__":
    scale, transpose = 1, True
    ks = 2 ** scale

    # deterministic small input: batch=2, 3 channels (forward implies RGB), 16x16
    x = jax.random.normal(jax.random.PRNGKey(0), (2, 3, 16, 16), jnp.float32)

    w = haar_grouped_weight(ks)                    # stands in for dct['rec2']
    A_dec = build_dec_matrix(w, ks, transpose)     # dec=True path
    A_rec = build_rec_matrix(w, ks, transpose)     # dec=False path

    # --- decomposition (dec=True, default constructor args) ---------------
    dec_out = jax.block_until_ready(wavelet_forward(x, A_dec, ks=ks, dec=True))
    assert dec_out.shape == (2, 12, 8, 8), dec_out.shape
    assert dec_out.dtype == jnp.float32
    assert bool(jnp.all(jnp.isfinite(dec_out)))

    ref_d = ref_dec(x, w, ks, transpose)
    assert bool(jnp.allclose(dec_out, ref_d, atol=1e-5, rtol=1e-5))

    # --- reconstruction (dec=False branch of the same module) -------------
    rec_out = jax.block_until_ready(
        wavelet_forward(dec_out, A_rec, ks=ks, dec=False))
    assert rec_out.shape == x.shape, rec_out.shape

    ref_r = ref_rec(dec_out, w, ks, transpose)
    assert bool(jnp.allclose(rec_out, ref_r, atol=1e-5, rtol=1e-5))
    # Haar filter bank is orthonormal -> rec(dec(x)) == x
    assert bool(jnp.allclose(rec_out, x, atol=1e-5, rtol=1e-5))

    print("KERNEL_OK")
</pallas_src>

<mosaic_0001>
module attributes {stable_mosaic.version = 11 : i64} {
  func.func @_pixel_matmul_kernel(%arg0: i32, %arg1: i32, %arg2: memref<12x12xf32, #tpu.memory_space<vmem>>, %arg3: memref<1x12x64xf32, #tpu.memory_space<vmem>>, %arg4: memref<1x12x64xf32, #tpu.memory_space<vmem>>) attributes {dimension_semantics = [#tpu.dimension_semantics<parallel>, #tpu.dimension_semantics<parallel>], iteration_bounds = array<i64: 2, 1>, scalar_prefetch = 0 : i64, scratch_operands = 0 : i64, tpu.core_type = #tpu.core_type<tc>, window_params = [{pipeline_mode = #tpu.pipeline_mode<synchronous>, transform_indices = @transform_0, window_bounds = array<i64: 12, 12>}, {transform_indices = @transform_1, window_bounds = array<i64: 1, 12, 64>}, {transform_indices = @transform_2, window_bounds = array<i64: 1, 12, 64>}]} {
    %c0 = arith.constant 0 : index
    %c0_0 = arith.constant 0 : index
    %0 = vector.load %arg2[%c0, %c0_0] : memref<12x12xf32, #tpu.memory_space<vmem>>, vector<12x12xf32>
    %c0_1 = arith.constant 0 : index
    %c0_2 = arith.constant 0 : index
    %c0_3 = arith.constant 0 : index
    %1 = vector.load %arg3[%c0_1, %c0_2, %c0_3] : memref<1x12x64xf32, #tpu.memory_space<vmem>>, vector<1x12x64xf32>
    %2 = vector.shape_cast %1 : vector<1x12x64xf32> to vector<12x64xf32>
    %cst = arith.constant dense<0.000000e+00> : vector<12x64xf32>
    %3 = tpu.matmul %0, %2, %cst {dimension_numbers = #tpu.dot_dimension_numbers<[1], [0], [0], [1], [0, 0, 1, 1], [], []>, precision = #tpu.contract_precision<fp32>} : vector<12x12xf32>, vector<12x64xf32>, vector<12x64xf32> -> vector<12x64xf32>
    %c0_4 = arith.constant 0 : index
    %c0_5 = arith.constant 0 : index
    %c0_6 = arith.constant 0 : index
    %4 = vector.load %arg4[%c0_4, %c0_5, %c0_6] : memref<1x12x64xf32, #tpu.memory_space<vmem>>, vector<1x12x64xf32>
    %5 = vector.shape_cast %4 : vector<1x12x64xf32> to vector<12x64xf32>
    %6 = vector.shape_cast %3 : vector<12x64xf32> to vector<1x12x64xf32>
    tpu.vector_store %arg4[%c0_4, %c0_5, %c0_6], %6 {strides = array<i32>} : memref<1x12x64xf32, #tpu.memory_space<vmem>>, vector<1x12x64xf32>,
    return
  }
  func.func @transform_0(%arg0: i32, %arg1: i32) -> (i32, i32) {
    %c0_i32 = arith.constant 0 : i32
    %c0_i32_0 = arith.constant 0 : i32
    %c0_i32_1 = arith.constant 0 : i32
    return %c0_i32, %c0_i32_0 : i32, i32
  }
  func.func @transform_1(%arg0: i32, %arg1: i32) -> (i32, i32, i32) {
    %c0_i32 = arith.constant 0 : i32
    %c0_i32_0 = arith.constant 0 : i32
    return %arg0, %c0_i32, %arg1 : i32, i32, i32
  }
  func.func @transform_2(%arg0: i32, %arg1: i32) -> (i32, i32, i32) {
    %c0_i32 = arith.constant 0 : i32
    %c0_i32_0 = arith.constant 0 : i32
    return %arg0, %c0_i32, %arg1 : i32, i32, i32
  }
}

</mosaic_0001>

<llo_original>
// kernel: wavelet_forward.1
$region0: #{wavelet_forward.1}
  #allocation0 [shape = 'u32[]', space=smem, size = 0x4, offset = 0x4, fixed_abs, tag = 'smem constant byte address 0x4 - core index']
  #allocation1 [shape = 'u32[144,128]{1,0:T(1,128)}', space=vmem, size = 0x12000, scoped, tag = 'internal scratch']
  %s0 = inlined_call_operand.vmem [shape: f32[12,12], index: 0, kind: input, shape index: {}]
  %s1 = inlined_call_operand.vmem [shape: f32[2,12,64], index: 1, kind: input, shape index: {}]
  %s2 = inlined_call_operand.vmem [shape: f32[2,12,64], index: 2, kind: output, shape index: {}]
  %s3 = sld [smem:[#allocation0]]
  $region41: #{wavelet_forward.1} parent=0
    _
  %s5 = ssub.s32 1, %s3
  %s6 = scalar_select 0, %s5, %s3
  loop: start=0, step=1, limit=4
  $region2: #{wavelet_forward.1} parent=0 // loop_pre_header
    _
  $region3: #{wavelet_forward.1} parent=0 // loop_header
    %s8 = sphi 0, %s12
    %p9 = scmp.ge.s32.totalorder %s8, 4
    %s15 = sphi 0, %s27
    %s16 = sphi 0, %s23
    %s17 = sphi 0, %s15
    %s18 = sphi 0, %s16
    %s19 = sphi 0, %s17
    %s20 = sphi 0, %s18
    %s28 = sphi 0, %s28
    %s30 = sphi 0, %s28
    %s31 = sphi 0, %s30
    %s45 = sphi 0, %s31
    %s53 = sphi 0, %s55
    %s56 = sphi 0, %s53
    %s57 = sphi 0, %s56
    %s73 = sphi 0, %s57
    %s81 = sphi 0, %s83
    %s84 = sphi 0, %s81
    %s85 = sphi 0, %s84
    %s101 = sphi 0, %s85
  $region4: #{wavelet_forward.1} parent=0 // loop_header_branch
    %11 = sbr.rel (%p9) target = $region8
  $region5: #{wavelet_forward.1} parent=0 // loop_body
    %s13 = ssub.s32 %s8, 1
    %s14 = ssub.s32 %s8, 2
    %s21 = sadd.s32 1, %s16
    %p22 = scmp.ge.s32.totalorder %s21, 1
    %s23 = scalar_select %p22, 0, %s21
    %s24 = sadd.s32 1, %s15
    %s25 = scalar_select %p22, %s24, %s15
    %p26 = scmp.ge.s32.totalorder %s25, 2
    %s27 = scalar_select %p26, 0, %s25
    %s29 = sadd.s32 %s28, 1
    %p32 = scmp.eq.s32.totalorder %s8, 1
    %p33 = scmp.ne.s32.totalorder %s28, %s30
    %p34 = scmp.eq.s32.totalorder %s8, 0
    %p35 = por %p33, %p34
    %p36 = scmp.ne.s32.totalorder %s28, %s30
    %p37 = scmp.eq.s32.totalorder %s13, 1
    %p38 = por %p36, %p37
    %p39 = scmp.ne.s32.totalorder %s30, %s31
    %p40 = scmp.eq.s32.totalorder %s13, 0
    %p41 = por %p39, %p40
    %p42 = scmp.ne.s32.totalorder %s30, %s31
    %p43 = scmp.eq.s32.totalorder %s14, 1
    %p44 = por %p42, %p43
    %p46 = scmp.ne.s32.totalorder %s31, %s45
    %p47 = scmp.eq.s32.totalorder %s14, 0
    %p48 = por %p46, %p47
    %s49 = ssub.s32 %s15, %s27
    %s50 = ssub.s32 %s16, %s23
    %s51 = sor.u32 %s49, %s50
    %p52 = scmp.eq.s32.totalorder %s51, 0
    %s54 = sadd.s32 %s53, 1
    %s55 = scalar_select %p52, %s53, %s54
    %p58 = pneg %p52
    %p59 = scmp.eq.s32.totalorder %s8, 1
    %p60 = por %p58, %p59
    %p61 = scmp.ne.s32.totalorder %s53, %s56
    %p62 = scmp.eq.s32.totalorder %s8, 0
    %p63 = por %p61, %p62
    %p64 = scmp.ne.s32.totalorder %s53, %s56
    %p65 = scmp.eq.s32.totalorder %s13, 1
    %p66 = por %p64, %p65
    %p67 = scmp.ne.s32.totalorder %s56, %s57
    %p68 = scmp.eq.s32.totalorder %s13, 0
    %p69 = por %p67, %p68
    %p70 = scmp.ne.s32.totalorder %s56, %s57
    %p71 = scmp.eq.s32.totalorder %s14, 1
    %p72 = por %p70, %p71
    %p74 = scmp.ne.s32.totalorder %s57, %s73
    %p75 = scmp.eq.s32.totalorder %s14, 0
    %p76 = por %p74, %p75
    %s77 = ssub.s32 %s15, %s27
    %s78 = ssub.s32 %s16, %s23
    %s79 = sor.u32 %s77, %s78
    %p80 = scmp.eq.s32.totalorder %s79, 0
    %s82 = sadd.s32 %s81, 1
    %s83 = scalar_select %p80, %s81, %s82
    %p86 = pneg %p80
    %p87 = scmp.eq.s32.totalorder %s8, 1
    %p88 = por %p86, %p87
    %p89 = scmp.ne.s32.totalorder %s81, %s84
    %p90 = scmp.eq.s32.totalorder %s8, 0
    %p91 = por %p89, %p90
    %p92 = scmp.ne.s32.totalorder %s81, %s84
    %p93 = scmp.eq.s32.totalorder %s13, 1
    %p94 = por %p92, %p93
    %p95 = scmp.ne.s32.totalorder %s84, %s85
    %p96 = scmp.eq.s32.totalorder %s13, 0
    %p97 = por %p95, %p96
    %p98 = scmp.ne.s32.totalorder %s84, %s85
    %p99 = scmp.eq.s32.totalorder %s14, 1
    %p100 = por %p98, %p99
    %p102 = scmp.ne.s32.totalorder %s85, %s101
    %p103 = scmp.eq.s32.totalorder %s14, 0
    %p104 = por %p102, %p103
    %p105 = scmp.le.s32.totalorder 1, %s8
    %p106 = scmp.lt.s32.totalorder %s8, 3
    %p107 = pnand %p105, %p106
    %p108 = pneg %p107
    // Predicated region
    $region9: #{wavelet_forward.1} parent=5 // pred_check
      _
    $region10: #{wavelet_forward.1} parent=5 // pred_check_branch
      %110 = sbr.rel (%p107) target = $region12
    $region11: #{wavelet_forward.1} parent=5 // pred_region
      %s111 = ssub.s32 %s8, 1
      // Predicated region
      $region13: #{wavelet_forward.1} parent=11 // pred_check
        %p112 = pneg %p41
      $region14: #{wavelet_forward.1} parent=11 // pred_check_branch
        %114 = sbr.rel (%p112) target = $region16
      $region15: #{wavelet_forward.1} parent=11 // pred_region
        _
      $region16: #{wavelet_forward.1} parent=11 // pred_fallthru
        _
    $region12: #{wavelet_forward.1} parent=5 // pred_fallthru
      _
    %p115 = scmp.lt.s32.totalorder %s8, 2
    // Predicated region
    $region17: #{wavelet_forward.1} parent=5 // pred_check
      %p116 = pneg %p115
    $region18: #{wavelet_forward.1} parent=5 // pred_check_branch
      %118 = sbr.rel (%p116) target = $region20
    $region19: #{wavelet_forward.1} parent=5 // pred_region
      // Predicated region
      $region21: #{wavelet_forward.1} parent=19 // pred_check
        %p119 = pneg %p63
      $region22: #{wavelet_forward.1} parent=19 // pred_check_branch
        %121 = sbr.rel (%p119) target = $region24
      $region23: #{wavelet_forward.1} parent=19 // pred_region
        %p122 = scmp.lt.s32.totalorder %s15, 1
        %s123 = scalar_select %p122, %s15, 1
        %p124 = scmp.lt.s32.totalorder %s16, 0
        %s125 = scalar_select %p124, %s16, 0
        %s126 = smul.addr %s123, 2
        %s127 = sadd.s32 %s125, %s126
        %s128 = smul.addr %s127, 8
        %s129 = scalar_lea.vmem %s1, %s128
      $region24: #{wavelet_forward.1} parent=19 // pred_fallthru
        _
    $region20: #{wavelet_forward.1} parent=5 // pred_fallthru
      _
    %p130 = scmp.le.s32.totalorder 1, %s8
    %p131 = scmp.lt.s32.totalorder %s8, 3
    %p132 = pnand %p130, %p131
    %p133 = pneg %p132
    // Predicated region
    $region25: #{wavelet_forward.1} parent=5 // pred_check
      _
    $region26: #{wavelet_forward.1} parent=5 // pred_check_branch
      %135 = sbr.rel (%p132) target = $region28
    $region27: #{wavelet_forward.1} parent=5 // pred_region
      %s136 = ssub.s32 %s8, 1
      %p137 = pneg %p41
      %p138 = pneg %p38
      %p139 = scmp.lt.s32.totalorder %s17, 1
      %s140 = scalar_select %p139, %s17, 1
      %p141 = scmp.lt.s32.totalorder %s18, 0
      %s142 = scalar_select %p141, %s18, 0
      %s143 = smul.addr %s140, 2
      %s144 = sadd.s32 %s142, %s143
      %s145 = smul.addr %s144, 8
      %s146 = scalar_lea.vmem %s1, %s145
      %p147 = pneg %p69
      %p148 = pneg %p66
      %p149 = pneg %p97
      %p150 = pneg %p94
      %p151 = scmp.lt.s32.totalorder %s17, 1
      %s152 = scalar_select %p151, %s17, 1
      %p153 = scmp.lt.s32.totalorder %s18, 0
      %s154 = scalar_select %p153, %s18, 0
      %s155 = smul.addr %s152, 2
      %s156 = sadd.s32 %s154, %s155
      %s157 = smul.addr %s156, 8
      %s158 = scalar_lea.vmem %s2, %s157
      %p159 = scmp.lt.s32.totalorder %s17, 1
      %s160 = scalar_select %p159, %s17, 1
      %p161 = scmp.lt.s32.totalorder %s18, 0
      %s162 = scalar_select %p161, %s18, 0
      %s163 = smul.addr %s160, 2
      %s164 = sadd.s32 %s162, %s163
      %s165 = smul.addr %s164, 8
      %s166 = scalar_lea.vmem %s1, %s165
      %p167 = scmp.lt.s32.totalorder %s17, 1
      %s168 = scalar_select %p167, %s17, 1
      %p169 = scmp.lt.s32.totalorder %s18, 0
      %s170 = scalar_select %p169, %s18, 0
      %s171 = smul.addr %s168, 2
      %s172 = sadd.s32 %s170, %s171
      %s173 = smul.addr %s172, 8
      %s174 = scalar_lea.vmem %s2, %s173
      %v175 = vld [vmem:[%s0] sm:$0xff]
      %v176 = vld [vmem:[%s0 + $0x8] sm:$0xf]
      %v177 = vld [vmem:[%s166] sm:$0xff]
      %v178 = vld [vmem:[%s166 + $0x8] sm:$0xf]
      %vm179 = vcmask 97280
      %v181 = vsel %vm179, %v175, 0
      %v184 = vsel %vm179, %v176, 0
      %vm186 = vcmask 1043456
      %v188 = vsel %vm186, %v178, 0
      %190 = vmatprep.subr.mxu0 0.0
      %v191 = vand.u32 %v177, 4294901760
      %192 = vmatpush1.msra.mxu0 %v191
      %193 = vmatprep.subr.mxu0 0.0
      %v194 = vand.u32 %v188, 4294901760
      %195 = vmatpush1.msra.mxu0 %v194
      %196 = vmatprep.subr.mxu0 0.0
      %197 = vmatpush1.msra.mxu0 0.0
      %198 = vmatprep.subr.mxu0 0.0
      %199 = vmatpush1.msra.mxu0 0.0
      %200 = vmatprep.subr.mxu0 0.0
      %201 = vmatpush1.msra.mxu0 0.0
      %202 = vmatprep.subr.mxu0 0.0
      %203 = vmatpush1.msra.mxu0 0.0
      %204 = vmatprep.subr.mxu0 0.0
      %205 = vmatpush1.msra.mxu0 0.0
      %206 = vmatprep.subr.mxu0 0.0
      %207 = vmatpush1.msra.mxu0 0.0
      %208 = vmatprep.subr.mxu0 0.0
      %209 = vmatpush1.msra.mxu0 0.0
      %210 = vmatprep.subr.mxu0 0.0
      %211 = vmatpush1.msra.mxu0 0.0
      %212 = vmatprep.subr.mxu0 0.0
      %213 = vmatpush1.msra.mxu0 0.0
      %214 = vmatprep.subr.mxu0 0.0
      %215 = vmatpush1.msra.mxu0 0.0
      %216 = vmatprep.subr.mxu0 0.0
      %217 = vmatpush1.msra.mxu0 0.0
      %218 = vmatprep.subr.mxu0 0.0
      %219 = vmatpush1.msra.mxu0 0.0
      %220 = vmatprep.subr.mxu0 0.0
      %221 = vmatpush1.msra.mxu0 0.0
      %222 = vmatprep.subr.mxu0 0.0
      %223 = vmatpush1.msra.mxu0 0.0
      %224 = vmatprep.subr.mxu0 0.0
      %225 = vmatpush1.msra.mxu0 0.0
      %226 = vmatprep.subr.mxu0 0.0
      %227 = vmatpush1.msra.mxu0 0.0
      %228 = vmatprep.subr.mxu0 0.0
      %229 = vmatpush1.msra.mxu0 0.0
      %230 = vmatprep.subr.mxu0 0.0
      %231 = vmatpush1.msra.mxu0 0.0
      %232 = vmatprep.subr.mxu0 0.0
      %233 = vmatpush1.msra.mxu0 0.0
      %234 = vmatprep.subr.mxu0 0.0
      %235 = vmatpush1.msra.mxu0 0.0
      %236 = vmatprep.subr.mxu0 0.0
      %237 = vmatpush1.msra.mxu0 0.0
      %238 = vmatprep.subr.mxu0 0.0
      %239 = vmatpush1.msra.mxu0 0.0
      %240 = vmatprep.subr.mxu0 0.0
      %241 = vmatpush1.msra.mxu0 0.0
      %242 = vmatprep.subr.mxu0 0.0
      %243 = vmatpush1.msra.mxu0 0.0
      %244 = vmatprep.subr.mxu0 0.0
      %245 = vmatpush1.msra.mxu0 0.0
      %246 = vmatprep.subr.mxu0 0.0
      %247 = vmatpush1.msra.mxu0 0.0
      %248 = vmatprep.subr.mxu0 0.0
      %249 = vmatpush1.msra.mxu0 0.0
      %250 = vmatprep.subr.mxu0 0.0
      %251 = vmatpush1.msra.mxu0 0.0
      %252 = vmatprep.subr.mxu0 0.0
      %253 = vmatpush1.msra.mxu0 0.0
      %254 = vmatprep.subr.mxu0 0.0
      %255 = vmatpush1.msra.mxu0 0.0
      %256 = vmatprep.mubr.f32.mxu0 0.0
      %v257 = vand.u32 %v181, 4294901760
      %v258 = vsub.f32 %v181, %v257
      %v259 = vand.u32 %v258, 4294901760
      %v260 = vsub.f32 %v258, %v259
      %v261 = vand.u32 %v260, 4294901760
      %262 = vmatmul.mubr.f32.gmra.mrb[0].mxu0 %v261
      %v263 = vpop.f32.mrb[0].mxu0
      %v264 = vadd.f32 0.0, %v263
      %v265 = vpop.f32.mrb[0].mxu0
      %266 = vmatprep.mubr.f32.mxu0 0.0
      %v267 = vand.u32 %v184, 4294901760
      %v268 = vsub.f32 %v184, %v267
      %v269 = vand.u32 %v268, 4294901760
      %v270 = vsub.f32 %v268, %v269
      %v271 = vand.u32 %v270, 4294901760
      %272 = vmatmul.mubr.f32.gmra.mrb[0].mxu0 %v271
      %v273 = vpop.f32.mrb[0].mxu0
      %v274 = vadd.f32 0.0, %v273
      %v275 = vpop.f32.mrb[0].mxu0
      %276 = vdwg.mxu0
      %277 = vmatprep.subr.mxu0 0.0
      %v278 = vand.u32 %v177, 4294901760
      %v279 = vsub.f32 %v177, %v278
      %v280 = vand.u32 %v279, 4294901760
      %v281 = vsub.f32 %v279, %v280
      %v282 = vand.u32 %v281, 4294901760
      %283 = vmatpush1.msra.mxu0 %v282
      %284 = vmatprep.subr.mxu0 0.0
      %v285 = vand.u32 %v188, 4294901760
      %v286 = vsub.f32 %v188, %v285
      %v287 = vand.u32 %v286, 4294901760
      %v288 = vsub.f32 %v286, %v287
      %v289 = vand.u32 %v288, 4294901760
      %290 = vmatpush1.msra.mxu0 %v289
      %291 = vmatprep.subr.mxu0 0.0
      %292 = vmatpush1.msra.mxu0 0.0
      %293 = vmatprep.subr.mxu0 0.0
      %294 = vmatpush1.msra.mxu0 0.0
      %295 = vmatprep.subr.mxu0 0.0
      %296 = vmatpush1.msra.mxu0 0.0
      %297 = vmatprep.subr.mxu0 0.0
      %298 = vmatpush1.msra.mxu0 0.0
      %299 = vmatprep.subr.mxu0 0.0
      %300 = vmatpush1.msra.mxu0 0.0
      %301 = vmatprep.subr.mxu0 0.0
      %302 = vmatpush1.msra.mxu0 0.0
      %303 = vmatprep.subr.mxu0 0.0
      %304 = vmatpush1.msra.mxu0 0.0
      %305 = vmatprep.subr.mxu0 0.0
      %306 = vmatpush1.msra.mxu0 0.0
      %307 = vmatprep.subr.mxu0 0.0
      %308 = vmatpush1.msra.mxu0 0.0
      %309 = vmatprep.subr.mxu0 0.0
      %310 = vmatpush1.msra.mxu0 0.0
      %311 = vmatprep.subr.mxu0 0.0
      %312 = vmatpush1.msra.mxu0 0.0
      %313 = vmatprep.subr.mxu0 0.0
      %314 = vmatpush1.msra.mxu0 0.0
      %315 = vmatprep.subr.mxu0 0.0
      %316 = vmatpush1.msra.mxu0 0.0
      %317 = vmatprep.subr.mxu0 0.0
      %318 = vmatpush1.msra.mxu0 0.0
      %319 = vmatprep.subr.mxu0 0.0
      %320 = vmatpush1.msra.mxu0 0.0
      %321 = vmatprep.subr.mxu0 0.0
      %322 = vmatpush1.msra.mxu0 0.0
      %323 = vmatprep.subr.mxu0 0.0
      %324 = vmatpush1.msra.mxu0 0.0
      %325 = vmatprep.subr.mxu0 0.0
      %326 = vmatpush1.msra.mxu0 0.0
      %327 = vmatprep.subr.mxu0 0.0
      %328 = vmatpush1.msra.mxu0 0.0
      %329 = vmatprep.subr.mxu0 0.0
      %330 = vmatpush1.msra.mxu0 0.0
      %331 = vmatprep.subr.mxu0 0.0
      %332 = vmatpush1.msra.mxu0 0.0
      %333 = vmatprep.subr.mxu0 0.0
      %334 = vmatpush1.msra.mxu0 0.0
      %335 = vmatprep.subr.mxu0 0.0
      %336 = vmatpush1.msra.mxu0 0.0
      %337 = vmatprep.subr.mxu0 0.0
      %338 = vmatpush1.msra.mxu0 0.0
      %339 = vmatprep.subr.mxu0 0.0
      %340 = vmatpush1.msra.mxu0 0.0
      %341 = vmatprep.subr.mxu0 0.0
      %342 = vmatpush1.msra.mxu0 0.0
      %343 = vmatprep.subr.mxu0 0.0
      %344 = vmatpush1.msra.mxu0 0.0
      %345 = vmatprep.subr.mxu0 0.0
      %346 = vmatpush1.msra.mxu0 0.0
      %347 = vmatprep.subr.mxu0 0.0
      %348 = vmatpush1.msra.mxu0 0.0
      %349 = vmatprep.subr.mxu0 0.0
      %350 = vmatpush1.msra.mxu0 0.0
      %351 = vmatprep.mubr.f32.mxu0 0.0
      %v352 = vand.u32 %v181, 4294901760
      %353 = vmatmul.mubr.f32.gmra.mrb[0].mxu0 %v352
      %v354 = vpop.f32.mrb[0].mxu0
      %v355 = vadd.f32 %v264, %v354
      %v356 = vpop.f32.mrb[0].mxu0
      %357 = vmatprep.mubr.f32.mxu0 0.0
      %v358 = vand.u32 %v184, 4294901760
      %359 = vmatmul.mubr.f32.gmra.mrb[0].mxu0 %v358
      %v360 = vpop.f32.mrb[0].mxu0
      %v361 = vadd.f32 %v274, %v360
      %v362 = vpop.f32.mrb[0].mxu0
      %363 = vdwg.mxu0
      %364 = vmatprep.subr.mxu0 0.0
      %v365 = vand.u32 %v177, 4294901760
      %v366 = vsub.f32 %v177, %v365
      %367 = vmatpush1.msra.mxu0 %v366
      %368 = vmatprep.subr.mxu0 0.0
      %v369 = vand.u32 %v188, 4294901760
      %v370 = vsub.f32 %v188, %v369
      %371 = vmatpush1.msra.mxu0 %v370
      %372 = vmatprep.subr.mxu0 0.0
      %373 = vmatpush1.msra.mxu0 0.0
      %374 = vmatprep.subr.mxu0 0.0
      %375 = vmatpush1.msra.mxu0 0.0
      %376 = vmatprep.subr.mxu0 0.0
      %377 = vmatpush1.msra.mxu0 0.0
      %378 = vmatprep.subr.mxu0 0.0
      %379 = vmatpush1.msra.mxu0 0.0
      %380 = vmatprep.subr.mxu0 0.0
      %381 = vmatpush1.msra.mxu0 0.0
      %382 = vmatprep.subr.mxu0 0.0
      %383 = vmatpush1.msra.mxu0 0.0
      %384 = vmatprep.subr.mxu0 0.0
      %385 = vmatpush1.msra.mxu0 0.0
      %386 = vmatprep.subr.mxu0 0.0
      %387 = vmatpush1.msra.mxu0 0.0
      %388 = vmatprep.subr.mxu0 0.0
      %389 = vmatpush1.msra.mxu0 0.0
      %390 = vmatprep.subr.mxu0 0.0
      %391 = vmatpush1.msra.mxu0 0.0
      %392 = vmatprep.subr.mxu0 0.0
      %393 = vmatpush1.msra.mxu0 0.0
      %394 = vmatprep.subr.mxu0 0.0
      %395 = vmatpush1.msra.mxu0 0.0
      %396 = vmatprep.subr.mxu0 0.0
      %397 = vmatpush1.msra.mxu0 0.0
      %398 = vmatprep.subr.mxu0 0.0
      %399 = vmatpush1.msra.mxu0 0.0
      %400 = vmatprep.subr.mxu0 0.0
      %401 = vmatpush1.msra.mxu0 0.0
      %402 = vmatprep.subr.mxu0 0.0
      %403 = vmatpush1.msra.mxu0 0.0
      %404 = vmatprep.subr.mxu0 0.0
      %405 = vmatpush1.msra.mxu0 0.0
      %406 = vmatprep.subr.mxu0 0.0
      %407 = vmatpush1.msra.mxu0 0.0
      %408 = vmatprep.subr.mxu0 0.0
      %409 = vmatpush1.msra.mxu0 0.0
      %410 = vmatprep.subr.mxu0 0.0
      %411 = vmatpush1.msra.mxu0 0.0
      %412 = vmatprep.subr.mxu0 0.0
      %413 = vmatpush1.msra.mxu0 0.0
      %414 = vmatprep.subr.mxu0 0.0
      %415 = vmatpush1.msra.mxu0 0.0
      %416 = vmatprep.subr.mxu0 0.0
      %417 = vmatpush1.msra.mxu0 0.0
      %418 = vmatprep.subr.mxu0 0.0
      %419 = vmatpush1.msra.mxu0 0.0
      %420 = vmatprep.subr.mxu0 0.0
      %421 = vmatpush1.msra.mxu0 0.0
      %422 = vmatprep.subr.mxu0 0.0
      %423 = vmatpush1.msra.mxu0 0.0
      %424 = vmatprep.subr.mxu0 0.0
      %425 = vmatpush1.msra.mxu0 0.0
      %426 = vmatprep.subr.mxu0 0.0
      %427 = vmatpush1.msra.mxu0 0.0
      %428 = vmatprep.subr.mxu0 0.0
      %429 = vmatpush1.msra.mxu0 0.0
      %430 = vmatprep.subr.mxu0 0.0
      %431 = vmatpush1.msra.mxu0 0.0
      %432 = vmatprep.mubr.f32.mxu0 0.0
      %v433 = vand.u32 %v181, 4294901760
      %v434 = vsub.f32 %v181, %v433
      %435 = vmatmul.mubr.f32.gmra.mrb[0].mxu0 %v434
      %v436 = vpop.f32.mrb[0].mxu0
      %v437 = vadd.f32 %v355, %v436
      %v438 = vpop.f32.mrb[0].mxu0
      %439 = vmatprep.mubr.f32.mxu0 0.0
      %v440 = vand.u32 %v184, 4294901760
      %v441 = vsub.f32 %v184, %v440
      %442 = vmatmul.mubr.f32.gmra.mrb[0].mxu0 %v441
      %v443 = vpop.f32.mrb[0].mxu0
      %v444 = vadd.f32 %v361, %v443
      %v445 = vpop.f32.mrb[0].mxu0
      %446 = vdwg.mxu0
      %447 = vmatprep.subr.mxu0 0.0
      %v448 = vand.u32 %v177, 4294901760
      %449 = vmatpush1.msra.mxu0 %v448
      %450 = vmatprep.subr.mxu0 0.0
      %v451 = vand.u32 %v188, 4294901760
      %452 = vmatpush1.msra.mxu0 %v451
      %453 = vmatprep.subr.mxu0 0.0
      %454 = vmatpush1.msra.mxu0 0.0
      %455 = vmatprep.subr.mxu0 0.0
      %456 = vmatpush1.msra.mxu0 0.0
      %457 = vmatprep.subr.mxu0 0.0
      %458 = vmatpush1.msra.mxu0 0.0
      %459 = vmatprep.subr.mxu0 0.0
      %460 = vmatpush1.msra.mxu0 0.0
      %461 = vmatprep.subr.mxu0 0.0
      %462 = vmatpush1.msra.mxu0 0.0
      %463 = vmatprep.subr.mxu0 0.0
      %464 = vmatpush1.msra.mxu0 0.0
      %465 = vmatprep.subr.mxu0 0.0
      %466 = vmatpush1.msra.mxu0 0.0
      %467 = vmatprep.subr.mxu0 0.0
      %468 = vmatpush1.msra.mxu0 0.0
      %469 = vmatprep.subr.mxu0 0.0
      %470 = vmatpush1.msra.mxu0 0.0
      %471 = vmatprep.subr.mxu0 0.0
      %472 = vmatpush1.msra.mxu0 0.0
      %473 = vmatprep.subr.mxu0 0.0
      %474 = vmatpush1.msra.mxu0 0.0
      %475 = vmatprep.subr.mxu0 0.0
      %476 = vmatpush1.msra.mxu0 0.0
      %477 = vmatprep.subr.mxu0 0.0
      %478 = vmatpush1.msra.mxu0 0.0
      %479 = vmatprep.subr.mxu0 0.0
      %480 = vmatpush1.msra.mxu0 0.0
      %481 = vmatprep.subr.mxu0 0.0
      %482 = vmatpush1.msra.mxu0 0.0
      %483 = vmatprep.subr.mxu0 0.0
      %484 = vmatpush1.msra.mxu0 0.0
      %485 = vmatprep.subr.mxu0 0.0
      %486 = vmatpush1.msra.mxu0 0.0
      %487 = vmatprep.subr.mxu0 0.0
      %488 = vmatpush1.msra.mxu0 0.0
      %489 = vmatprep.subr.mxu0 0.0
      %490 = vmatpush1.msra.mxu0 0.0
      %491 = vmatprep.subr.mxu0 0.0
      %492 = vmatpush1.msra.mxu0 0.0
      %493 = vmatprep.subr.mxu0 0.0
      %494 = vmatpush1.msra.mxu0 0.0
      %495 = vmatprep.subr.mxu0 0.0
      %496 = vmatpush1.msra.mxu0 0.0
      %497 = vmatprep.subr.mxu0 0.0
      %498 = vmatpush1.msra.mxu0 0.0
      %499 = vmatprep.subr.mxu0 0.0
      %500 = vmatpush1.msra.mxu0 0.0
      %501 = vmatprep.subr.mxu0 0.0
      %502 = vmatpush1.msra.mxu0 0.0
      %503 = vmatprep.subr.mxu0 0.0
      %504 = vmatpush1.msra.mxu0 0.0
      %505 = vmatprep.subr.mxu0 0.0
      %506 = vmatpush1.msra.mxu0 0.0
      %507 = vmatprep.subr.mxu0 0.0
      %508 = vmatpush1.msra.mxu0 0.0
      %509 = vmatprep.subr.mxu0 0.0
      %510 = vmatpush1.msra.mxu0 0.0
      %511 = vmatprep.subr.mxu0 0.0
      %512 = vmatpush1.msra.mxu0 0.0
      %513 = vmatprep.mubr.f32.mxu0 0.0
      %v514 = vand.u32 %v181, 4294901760
      %v515 = vsub.f32 %v181, %v514
      %v516 = vand.u32 %v515, 4294901760
      %517 = vmatmul.mubr.f32.gmra.mrb[0].mxu0 %v516
      %v518 = vpop.f32.mrb[0].mxu0
      %v519 = vadd.f32 %v437, %v518
      %v520 = vpop.f32.mrb[0].mxu0
      %521 = vmatprep.mubr.f32.mxu0 0.0
      %v522 = vand.u32 %v184, 4294901760
      %v523 = vsub.f32 %v184, %v522
      %v524 = vand.u32 %v523, 4294901760
      %525 = vmatmul.mubr.f32.gmra.mrb[0].mxu0 %v524
      %v526 = vpop.f32.mrb[0].mxu0
      %v527 = vadd.f32 %v444, %v526
      %v528 = vpop.f32.mrb[0].mxu0
      %529 = vdwg.mxu0
      %530 = vmatprep.subr.mxu0 0.0
      %v531 = vand.u32 %v177, 4294901760
      %v532 = vsub.f32 %v177, %v531
      %v533 = vand.u32 %v532, 4294901760
      %534 = vmatpush1.msra.mxu0 %v533
      %535 = vmatprep.subr.mxu0 0.0
      %v536 = vand.u32 %v188, 4294901760
      %v537 = vsub.f32 %v188, %v536
      %v538 = vand.u32 %v537, 4294901760
      %539 = vmatpush1.msra.mxu0 %v538
      %540 = vmatprep.subr.mxu0 0.0
      %541 = vmatpush1.msra.mxu0 0.0
      %542 = vmatprep.subr.mxu0 0.0
      %543 = vmatpush1.msra.mxu0 0.0
      %544 = vmatprep.subr.mxu0 0.0
      %545 = vmatpush1.msra.mxu0 0.0
      %546 = vmatprep.subr.mxu0 0.0
      %547 = vmatpush1.msra.mxu0 0.0
      %548 = vmatprep.subr.mxu0 0.0
      %549 = vmatpush1.msra.mxu0 0.0
      %550 = vmatprep.subr.mxu0 0.0
      %551 = vmatpush1.msra.mxu0 0.0
      %552 = vmatprep.subr.mxu0 0.0
      %553 = vmatpush1.msra.mxu0 0.0
      %554 = vmatprep.subr.mxu0 0.0
      %555 = vmatpush1.msra.mxu0 0.0
      %556 = vmatprep.subr.mxu0 0.0
      %557 = vmatpush1.msra.mxu0 0.0
      %558 = vmatprep.subr.mxu0 0.0
      %559 = vmatpush1.msra.mxu0 0.0
      %560 = vmatprep.subr.mxu0 0.0
      %561 = vmatpush1.msra.mxu0 0.0
      %562 = vmatprep.subr.mxu0 0.0
      %563 = vmatpush1.msra.mxu0 0.0
      %564 = vmatprep.subr.mxu0 0.0
      %565 = vmatpush1.msra.mxu0 0.0
      %566 = vmatprep.subr.mxu0 0.0
      %567 = vmatpush1.msra.mxu0 0.0
      %568 = vmatprep.subr.mxu0 0.0
      %569 = vmatpush1.msra.mxu0 0.0
      %570 = vmatprep.subr.mxu0 0.0
      %571 = vmatpush1.msra.mxu0 0.0
      %572 = vmatprep.subr.mxu0 0.0
      %573 = vmatpush1.msra.mxu0 0.0
      %574 = vmatprep.subr.mxu0 0.0
      %575 = vmatpush1.msra.mxu0 0.0
      %576 = vmatprep.subr.mxu0 0.0
      %577 = vmatpush1.msra.mxu0 0.0
      %578 = vmatprep.subr.mxu0 0.0
      %579 = vmatpush1.msra.mxu0 0.0
      %580 = vmatprep.subr.mxu0 0.0
      %581 = vmatpush1.msra.mxu0 0.0
      %582 = vmatprep.subr.mxu0 0.0
      %583 = vmatpush1.msra.mxu0 0.0
      %584 = vmatprep.subr.mxu0 0.0
      %585 = vmatpush1.msra.mxu0 0.0
      %586 = vmatprep.subr.mxu0 0.0
      %587 = vmatpush1.msra.mxu0 0.0
      %588 = vmatprep.subr.mxu0 0.0
      %589 = vmatpush1.msra.mxu0 0.0
      %590 = vmatprep.subr.mxu0 0.0
      %591 = vmatpush1.msra.mxu0 0.0
      %592 = vmatprep.subr.mxu0 0.0
      %593 = vmatpush1.msra.mxu0 0.0
      %594 = vmatprep.subr.mxu0 0.0
      %595 = vmatpush1.msra.mxu0 0.0
      %596 = vmatprep.subr.mxu0 0.0
      %597 = vmatpush1.msra.mxu0 0.0
      %598 = vmatprep.subr.mxu0 0.0
      %599 = vmatpush1.msra.mxu0 0.0
      %600 = vmatprep.mubr.f32.mxu0 0.0
      %v601 = vand.u32 %v181, 4294901760
      %602 = vmatmul.mubr.f32.gmra.mrb[0].mxu0 %v601
      %v603 = vpop.f32.mrb[0].mxu0
      %v604 = vadd.f32 %v519, %v603
      %v605 = vpop.f32.mrb[0].mxu0
      %606 = vmatprep.mubr.f32.mxu0 0.0
      %v607 = vand.u32 %v184, 4294901760
      %608 = vmatmul.mubr.f32.gmra.mrb[0].mxu0 %v607
      %v609 = vpop.f32.mrb[0].mxu0
      %v610 = vadd.f32 %v527, %v609
      %v611 = vpop.f32.mrb[0].mxu0
      %612 = vdwg.mxu0
      %613 = vmatprep.subr.mxu0 0.0
      %v614 = vand.u32 %v177, 4294901760
      %615 = vmatpush1.msra.mxu0 %v614
      %616 = vmatprep.subr.mxu0 0.0
      %v617 = vand.u32 %v188, 4294901760
      %618 = vmatpush1.msra.mxu0 %v617
      %619 = vmatprep.subr.mxu0 0.0
      %620 = vmatpush1.msra.mxu0 0.0
      %621 = vmatprep.subr.mxu0 0.0
      %622 = vmatpush1.msra.mxu0 0.0
      %623 = vmatprep.subr.mxu0 0.0
      %624 = vmatpush1.msra.mxu0 0.0
      %625 = vmatprep.subr.mxu0 0.0
      %626 = vmatpush1.msra.mxu0 0.0
      %627 = vmatprep.subr.mxu0 0.0
      %628 = vmatpush1.msra.mxu0 0.0
      %629 = vmatprep.subr.mxu0 0.0
      %630 = vmatpush1.msra.mxu0 0.0
      %631 = vmatprep.subr.mxu0 0.0
      %632 = vmatpush1.msra.mxu0 0.0
      %633 = vmatprep.subr.mxu0 0.0
      %634 = vmatpush1.msra.mxu0 0.0
      %635 = vmatprep.subr.mxu0 0.0
      %636 = vmatpush1.msra.mxu0 0.0
      %637 = vmatprep.subr.mxu0 0.0
      %638 = vmatpush1.msra.mxu0 0.0
      %639 = vmatprep.subr.mxu0 0.0
      %640 = vmatpush1.msra.mxu0 0.0
      %641 = vmatprep.subr.mxu0 0.0
      %642 = vmatpush1.msra.mxu0 0.0
      %643 = vmatprep.subr.mxu0 0.0
      %644 = vmatpush1.msra.mxu0 0.0
      %645 = vmatprep.subr.mxu0 0.0
      %646 = vmatpush1.msra.mxu0 0.0
      %647 = vmatprep.subr.mxu0 0.0
      %648 = vmatpush1.msra.mxu0 0.0
      %649 = vmatprep.subr.mxu0 0.0
      %650 = vmatpush1.msra.mxu0 0.0
      %651 = vmatprep.subr.mxu0 0.0
      %652 = vmatpush1.msra.mxu0 0.0
      %653 = vmatprep.subr.mxu0 0.0
      %654 = vmatpush1.msra.mxu0 0.0
      %655 = vmatprep.subr.mxu0 0.0
      %656 = vmatpush1.msra.mxu0 0.0
      %657 = vmatprep.subr.mxu0 0.0
      %658 = vmatpush1.msra.mxu0 0.0
      %659 = vmatprep.subr.mxu0 0.0
      %660 = vmatpush1.msra.mxu0 0.0
      %661 = vmatprep.subr.mxu0 0.0
      %662 = vmatpush1.msra.mxu0 0.0
      %663 = vmatprep.subr.mxu0 0.0
      %664 = vmatpush1.msra.mxu0 0.0
      %665 = vmatprep.subr.mxu0 0.0
      %666 = vmatpush1.msra.mxu0 0.0
      %667 = vmatprep.subr.mxu0 0.0
      %668 = vmatpush1.msra.mxu0 0.0
      %669 = vmatprep.subr.mxu0 0.0
      %670 = vmatpush1.msra.mxu0 0.0
      %671 = vmatprep.subr.mxu0 0.0
      %672 = vmatpush1.msra.mxu0 0.0
      %673 = vmatprep.subr.mxu0 0.0
      %674 = vmatpush1.msra.mxu0 0.0
      %675 = vmatprep.subr.mxu0 0.0
      %676 = vmatpush1.msra.mxu0 0.0
      %677 = vmatprep.subr.mxu0 0.0
      %678 = vmatpush1.msra.mxu0 0.0
      %679 = vmatprep.mubr.f32.mxu0 0.0
      %v680 = vand.u32 %v181, 4294901760
      %681 = vmatmul.mubr.f32.gmra.mrb[0].mxu0 %v680
      %v682 = vpop.f32.mrb[0].mxu0
      %v683 = vadd.f32 %v604, %v682
      %v684 = vpop.f32.mrb[0].mxu0
      %685 = vmatprep.mubr.f32.mxu0 0.0
      %v686 = vand.u32 %v184, 4294901760
      %687 = vmatmul.mubr.f32.gmra.mrb[0].mxu0 %v686
      %v688 = vpop.f32.mrb[0].mxu0
      %v689 = vadd.f32 %v610, %v688
      %v690 = vpop.f32.mrb[0].mxu0
      %691 = vdwg.mxu0
      %vm692 = vcmask 523264
      %693 = vst.msk [vmem:[%s174] sm:$0xff] %vm692, %v683
      %vm694 = vcmask 519168
      %695 = vst.msk [vmem:[%s174 + $0x8] sm:$0xf] %vm694, %v689
      %p696 = scmp.lt.s32.totalorder %s17, 1
      %s697 = scalar_select %p696, %s17, 1
      %p698 = scmp.lt.s32.totalorder %s18, 0
      %s699 = scalar_select %p698, %s18, 0
      %s700 = smul.addr %s697, 2
      %s701 = sadd.s32 %s699, %s700
      %s702 = smul.addr %s701, 8
      %s703 = scalar_lea.vmem %s2, %s702
      // Predicated region
      $region29: #{wavelet_forward.1} parent=27 // pred_check
        %p704 = pneg %p94
      $region30: #{wavelet_forward.1} parent=27 // pred_check_branch
        %706 = sbr.rel (%p704) target = $region32
      $region31: #{wavelet_forward.1} parent=27 // pred_region
        _
      $region32: #{wavelet_forward.1} parent=27 // pred_fallthru
        _
    $region28: #{wavelet_forward.1} parent=5 // pred_fallthru
      _
    %p707 = scmp.le.s32.totalorder 2, %s8
    // Predicated region
    $region33: #{wavelet_forward.1} parent=5 // pred_check
      %p708 = pneg %p707
    $region34: #{wavelet_forward.1} parent=5 // pred_check_branch
      %710 = sbr.rel (%p708) target = $region36
    $region35: #{wavelet_forward.1} parent=5 // pred_region
      %s711 = ssub.s32 %s8, 2
      // Predicated region
      $region37: #{wavelet_forward.1} parent=35 // pred_check
        %p712 = pneg %p100
      $region38: #{wavelet_forward.1} parent=35 // pred_check_branch
        %714 = sbr.rel (%p712) target = $region40
      $region39: #{wavelet_forward.1} parent=35 // pred_region
        %p715 = scmp.lt.s32.totalorder %s19, 1
        %s716 = scalar_select %p715, %s19, 1
        %p717 = scmp.lt.s32.totalorder %s20, 0
        %s718 = scalar_select %p717, %s20, 0
        %s719 = smul.addr %s716, 2
        %s720 = sadd.s32 %s718, %s719
        %s721 = smul.addr %s720, 8
        %s722 = scalar_lea.vmem %s2, %s721
      $region40: #{wavelet_forward.1} parent=35 // pred_fallthru
        _
    $region36: #{wavelet_forward.1} parent=5 // pred_fallthru
      _
  $region6: #{wavelet_forward.1} parent=0 // loop_footer
    %s12 = sadd.s32 1, %s8
  $region7: #{wavelet_forward.1} parent=0 // loop_footer_branch
    %7 = sbr.rel target = $region3
  $region8: #{wavelet_forward.1} parent=0 // loop_exit
    _

</llo_original>
